<compile_context>
chip_gen: v5e
topology: v5e:2x2
jax: 0.10.0
libtpu: 0.0.40
codegen_flags: <defaults>
</compile_context>

<pallas_src>
import functools

import jax
import jax.numpy as jnp
import numpy as np
from jax import lax
from jax.experimental import pallas as pl
from jax.experimental.pallas import tpu as pltpu

_LANE = 128   # vreg lane width
_SUB = 8      # f32 sublane count


def _round_up(n: int, m: int) -> int:
    return ((n + m - 1) // m) * m


def _phys_constraint_kernel(x_ref, w_ref, b_ref, o_ref):
    # MXU: x (TB, in_p) contracted with w (out_p, in_p) on the in_p axis,
    # i.e. x @ w.T, accumulated in f32.
    y = lax.dot_general(
        x_ref[...], w_ref[...],
        dimension_numbers=(((1,), (1,)), ((), ())),
        preferred_element_type=jnp.float32,
    )
    y = y + b_ref[...]                       # (1, out_p) bias broadcasts over rows
    # sigmoid(y) = 0.5 * tanh(0.5 * y) + 0.5  -> one EUP tanh, f32 epilogue.
    s = 0.5 * jnp.tanh(0.5 * y) + 0.5
    o_ref[...] = (s * 0.3).astype(o_ref.dtype)


@functools.partial(jax.jit, static_argnames=("block_batch", "compute_dtype"))
def physical_constraint_layer(x, weight, bias, *, block_batch=512, compute_dtype=None):
    """Forward pass of PhysicalConstraintLayer.

    x:      (B, in_features)            float32
    weight: (out_features, in_features) -- PyTorch nn.Linear convention
    bias:   (out_features,)
    returns (B, out_features) = sigmoid(x @ weight.T + bias) * 0.3
    """
    B, in_f = x.shape
    out_f, _ = weight.shape
    out_dtype = x.dtype

    # --- Pad to TPU-friendly shapes (lane-dense output, aligned contraction). ---
    in_p = _round_up(max(in_f, _LANE), _LANE)
    out_p = _round_up(max(out_f, _LANE), _LANE)
    tb = min(block_batch, _round_up(B, _SUB))          # batch tile (multiple of 8)
    b_pad = _round_up(B, tb)

    x_p = jnp.pad(x, ((0, b_pad - B), (0, in_p - in_f)))
    w_p = jnp.pad(weight, ((0, out_p - out_f), (0, in_p - in_f)))
    b_p = jnp.pad(bias, (0, out_p - out_f)).reshape(1, out_p).astype(jnp.float32)

    if compute_dtype is not None:
        # bf16 feed for the MXU; accumulation & epilogue stay f32 in the kernel.
        x_p = x_p.astype(compute_dtype)
        w_p = w_p.astype(compute_dtype)

    grid = (b_pad // tb,)

    out_padded = pl.pallas_call(
        _phys_constraint_kernel,
        out_shape=jax.ShapeDtypeStruct((b_pad, out_p), out_dtype),
        grid=grid,
        in_specs=[
            pl.BlockSpec((tb, in_p), lambda i: (i, 0)),     # streamed over batch
            pl.BlockSpec((out_p, in_p), lambda i: (0, 0)),  # weight resident in VMEM
            pl.BlockSpec((1, out_p), lambda i: (0, 0)),     # bias resident in VMEM
        ],
        out_specs=pl.BlockSpec((tb, out_p), lambda i: (i, 0)),
        compiler_params=pltpu.CompilerParams(
            dimension_semantics=("parallel",),              # v7x: split batch across 2 TCs
        ),
    )(x_p, w_p, b_p)

    return out_padded[:B, :out_f]


def _xavier_uniform(key, out_features, in_features, dtype=jnp.float32):
    # Matches torch.nn.init.xavier_uniform_ (gain=1): U(-a, a), a = sqrt(6/(fan_in+fan_out))
    a = float(np.sqrt(6.0 / (in_features + out_features)))
    return jax.random.uniform(key, (out_features, in_features), dtype, -a, a)


def _linear_bias_default(key, out_features, in_features, dtype=jnp.float32):
    # PyTorch nn.Linear default bias init: U(-1/sqrt(fan_in), 1/sqrt(fan_in))
    bound = float(1.0 / np.sqrt(in_features))
    return jax.random.uniform(key, (out_features,), dtype, -bound, bound)


if __name__ == "__main__":
    key = jax.random.PRNGKey(0)
    k_x, k_w, k_b = jax.random.split(key, 3)

    batch = 8
    in_features = 32
    out_features = 16

    x = jax.random.normal(k_x, (batch, in_features), jnp.float32)
    weight = _xavier_uniform(k_w, out_features, in_features)
    bias = _linear_bias_default(k_b, out_features, in_features)

    # f32 path (default): tight tolerance.
    out = physical_constraint_layer(x, weight, bias)
    out = jax.block_until_ready(out)

    ref = jax.nn.sigmoid(x @ weight.T + bias) * 0.3
    np.testing.assert_allclose(np.asarray(out), np.asarray(ref), rtol=1e-5, atol=1e-5)

    # bf16-fed MXU path (v6e/v7x bandwidth option): looser tolerance vs f32 reference.
    out_bf16 = physical_constraint_layer(x, weight, bias, compute_dtype=jnp.bfloat16)
    out_bf16 = jax.block_until_ready(out_bf16)
    np.testing.assert_allclose(np.asarray(out_bf16), np.asarray(ref), rtol=0, atol=1e-2)

    print("KERNEL_OK")
</pallas_src>

<mosaic_0001>
module attributes {stable_mosaic.version = 11 : i64} {
  func.func @_phys_constraint_kernel(%arg0: i32, %arg1: memref<8x128xf32, #tpu.memory_space<vmem>>, %arg2: memref<128x128xf32, #tpu.memory_space<vmem>>, %arg3: memref<1x128xf32, #tpu.memory_space<vmem>>, %arg4: memref<8x128xf32, #tpu.memory_space<vmem>>) attributes {dimension_semantics = [#tpu.dimension_semantics<parallel>], iteration_bounds = array<i64: 1>, scalar_prefetch = 0 : i64, scratch_operands = 0 : i64, tpu.core_type = #tpu.core_type<tc>, window_params = [{transform_indices = @transform_0, window_bounds = array<i64: 8, 128>}, {pipeline_mode = #tpu.pipeline_mode<synchronous>, transform_indices = @transform_1, window_bounds = array<i64: 128, 128>}, {pipeline_mode = #tpu.pipeline_mode<synchronous>, transform_indices = @transform_2, window_bounds = array<i64: 1, 128>}, {transform_indices = @transform_3, window_bounds = array<i64: 8, 128>}]} {
    %c0 = arith.constant 0 : index
    %c0_0 = arith.constant 0 : index
    %0 = vector.load %arg1[%c0, %c0_0] : memref<8x128xf32, #tpu.memory_space<vmem>>, vector<8x128xf32>
    %c0_1 = arith.constant 0 : index
    %c0_2 = arith.constant 0 : index
    %1 = vector.load %arg2[%c0_1, %c0_2] : memref<128x128xf32, #tpu.memory_space<vmem>>, vector<128x128xf32>
    %cst = arith.constant dense<0.000000e+00> : vector<8x128xf32>
    %2 = tpu.matmul %0, %1, %cst {dimension_numbers = #tpu.dot_dimension_numbers<[1], [1], [0], [0], [0, 0, 1, 0], [], []>} : vector<8x128xf32>, vector<128x128xf32>, vector<8x128xf32> -> vector<8x128xf32>
    %c0_3 = arith.constant 0 : index
    %c0_4 = arith.constant 0 : index
    %3 = vector.load %arg3[%c0_3, %c0_4] : memref<1x128xf32, #tpu.memory_space<vmem>>, vector<1x128xf32>
    %4 = vector.broadcast %3 : vector<1x128xf32> to vector<8x128xf32>
    %5 = arith.addf %2, %4 : vector<8x128xf32>
    %cst_5 = arith.constant 5.000000e-01 : f32
    %6 = vector.broadcast %cst_5 : f32 to vector<8x128xf32>
    %7 = arith.mulf %6, %5 : vector<8x128xf32>
    %8 = math.tanh %7 : vector<8x128xf32>
    %cst_6 = arith.constant 5.000000e-01 : f32
    %9 = vector.broadcast %cst_6 : f32 to vector<8x128xf32>
    %10 = arith.mulf %9, %8 : vector<8x128xf32>
    %cst_7 = arith.constant 5.000000e-01 : f32
    %11 = vector.broadcast %cst_7 : f32 to vector<8x128xf32>
    %12 = arith.addf %10, %11 : vector<8x128xf32>
    %cst_8 = arith.constant 3.000000e-01 : f32
    %13 = vector.broadcast %cst_8 : f32 to vector<8x128xf32>
    %14 = arith.mulf %12, %13 : vector<8x128xf32>
    %c0_9 = arith.constant 0 : index
    %c0_10 = arith.constant 0 : index
    %15 = vector.load %arg4[%c0_9, %c0_10] : memref<8x128xf32, #tpu.memory_space<vmem>>, vector<8x128xf32>
    tpu.vector_store %arg4[%c0_9, %c0_10], %14 {strides = array<i32>} : memref<8x128xf32, #tpu.memory_space<vmem>>, vector<8x128xf32>,
    return
  }
  func.func @transform_0(%arg0: i32) -> (i32, i32) {
    %c0_i32 = arith.constant 0 : i32
    %c0_i32_0 = arith.constant 0 : i32
    return %arg0, %c0_i32 : i32, i32
  }
  func.func @transform_1(%arg0: i32) -> (i32, i32) {
    %c0_i32 = arith.constant 0 : i32
    %c0_i32_0 = arith.constant 0 : i32
    %c0_i32_1 = arith.constant 0 : i32
    return %c0_i32, %c0_i32_0 : i32, i32
  }
  func.func @transform_2(%arg0: i32) -> (i32, i32) {
    %c0_i32 = arith.constant 0 : i32
    %c0_i32_0 = arith.constant 0 : i32
    %c0_i32_1 = arith.constant 0 : i32
    return %c0_i32, %c0_i32_0 : i32, i32
  }
  func.func @transform_3(%arg0: i32) -> (i32, i32) {
    %c0_i32 = arith.constant 0 : i32
    %c0_i32_0 = arith.constant 0 : i32
    return %arg0, %c0_i32 : i32, i32
  }
}

</mosaic_0001>

<llo_original>
// kernel: physical_constraint_layer.1
$region0: #{physical_constraint_layer.1}
  #allocation0 [shape = 'u32[]', space=smem, size = 0x4, offset = 0x4, fixed_abs, tag = 'smem constant byte address 0x4 - core index']
  #allocation1 [shape = 'u32[72,128]{1,0:T(1,128)}', space=vmem, size = 0x9000, scoped, tag = 'internal scratch']
  %s0 = inlined_call_operand.vmem [shape: f32[8,128], index: 0, kind: input, shape index: {}]
  %s1 = inlined_call_operand.vmem [shape: f32[128,128], index: 1, kind: input, shape index: {}]
  %s2 = inlined_call_operand.vmem [shape: f32[1,128], index: 2, kind: input, shape index: {}]
  %s3 = inlined_call_operand.hbm [shape: f32[8,128], index: 3, kind: output, shape index: {}]
  %s4 = sld [smem:[#allocation0]]
  $region22: #{physical_constraint_layer.1} parent=0
    _
  %s6 = ssub.s32 1, %s4
  %s7 = scalar_select 0, %s6, %s4
  $region1: #{physical_constraint_layer.1} parent=0
    #allocation2 [shape = 'u8[4096]{0}', space=vmem, size = 0x1000, scoped, tag = 'output window, operand 0, single buffered']
    #allocation3 [shape = 's32[1]{0}', space=sflag, size = 0x4, scoped, tag = 'scoped memory for physical_constraint_layer.1']
    %8 = vsyncpa [#allocation3], 0
    // Predicated region
    $region2: #{physical_constraint_layer.1} parent=1 // pred_check
      _
    $region3: #{physical_constraint_layer.1} parent=1 // pred_check_branch
      %10 = sbr.rel (0) target = $region5
    $region4: #{physical_constraint_layer.1} parent=1 // pred_region
      _
    $region5: #{physical_constraint_layer.1} parent=1 // pred_fallthru
      _
    // Predicated region
    $region6: #{physical_constraint_layer.1} parent=1 // pred_check
      _
    $region7: #{physical_constraint_layer.1} parent=1 // pred_check_branch
      %12 = sbr.rel (0) target = $region9
    $region8: #{physical_constraint_layer.1} parent=1 // pred_region
      _
    $region9: #{physical_constraint_layer.1} parent=1 // pred_fallthru
      _
    // Predicated region
    $region10: #{physical_constraint_layer.1} parent=1 // pred_check
      _
    $region11: #{physical_constraint_layer.1} parent=1 // pred_check_branch
      %14 = sbr.rel (0) target = $region13
    $region12: #{physical_constraint_layer.1} parent=1 // pred_region
      _
    $region13: #{physical_constraint_layer.1} parent=1 // pred_fallthru
      _
    %v15 = vld [vmem:[%s0] sm:$0xff]
    %v16 = vld [vmem:[%s1] sm:$0xff]
    %v17 = vld [vmem:[%s1 + $0x8] sm:$0xff]
    %v18 = vld [vmem:[%s1 + $0x10] sm:$0xff]
    %v19 = vld [vmem:[%s1 + $0x18] sm:$0xff]
    %v20 = vld [vmem:[%s1 + $0x20] sm:$0xff]
    %v21 = vld [vmem:[%s1 + $0x28] sm:$0xff]
    %v22 = vld [vmem:[%s1 + $0x30] sm:$0xff]
    %v23 = vld [vmem:[%s1 + $0x38] sm:$0xff]
    %v24 = vld [vmem:[%s1 + $0x40] sm:$0xff]
    %v25 = vld [vmem:[%s1 + $0x48] sm:$0xff]
    %v26 = vld [vmem:[%s1 + $0x50] sm:$0xff]
    %v27 = vld [vmem:[%s1 + $0x58] sm:$0xff]
    %v28 = vld [vmem:[%s1 + $0x60] sm:$0xff]
    %v29 = vld [vmem:[%s1 + $0x68] sm:$0xff]
    %v30 = vld [vmem:[%s1 + $0x70] sm:$0xff]
    %v31 = vld [vmem:[%s1 + $0x78] sm:$0xff]
    %v32 = vld [vmem:[%s2] sm:$0x1]
    %v34 = vperm.slane %v32, 0
    %36 = vmatpush.xpose.msra.mxu0 %v31
    %37 = vmatpush.xpose.msra.mxu0 %v30
    %38 = vmatpush.xpose.msra.mxu0 %v29
    %39 = vmatpush.xpose.msra.mxu0 %v28
    %40 = vmatpush.xpose.msra.mxu0 %v27
    %41 = vmatpush.xpose.msra.mxu0 %v26
    %42 = vmatpush.xpose.msra.mxu0 %v25
    %43 = vmatpush.xpose.msra.mxu0 %v24
    %44 = vmatpush.xpose.msra.mxu0 %v23
    %45 = vmatpush.xpose.msra.mxu0 %v22
    %46 = vmatpush.xpose.msra.mxu0 %v21
    %47 = vmatpush.xpose.msra.mxu0 %v20
    %48 = vmatpush.xpose.msra.mxu0 %v19
    %49 = vmatpush.xpose.msra.mxu0 %v18
    %50 = vmatpush.xpose.msra.mxu0 %v17
    %51 = vmatpush.xpose.msra.mxu0 %v16
    %52 = vmatmul.f32.gmra.mxu0 %v15
    %v53 = vpop.f32.mrf.mxu0
    %v54 = vadd.f32 %v34, %v53
    %55 = vdwg.mxu0
    %v56 = vmul.f32 %v54, 0.5
    %v57 = vtanh.pop %v56
    %v58 = vmul.f32 %v57, 0.5
    %v59 = vadd.f32 %v58, 0.5
    %v60 = vmul.f32 %v59, 0.3
    %61 = vst [vmem:[#allocation2] sm:$0xff] %v60
    // Predicated region
    $region14: #{physical_constraint_layer.1} parent=1 // pred_check
      _
    $region15: #{physical_constraint_layer.1} parent=1 // pred_check_branch
      %63 = sbr.rel (0) target = $region17
    $region16: #{physical_constraint_layer.1} parent=1 // pred_region
      %65 = vsyncadd [#allocation3], 0
      %s67 = sshll.u32 [#allocation2], 4
      %s68 = int_to_ptr.vmem [resolvable:$true] %s67
      %s69 = sshll.u32 %s3, 4
      %s70 = int_to_ptr.hbm [resolvable:$true] %s69
      %72 = dma.vmem_to_hbm [thread:$0]  %s68, 128, %s70, [#allocation3]
    $region17: #{physical_constraint_layer.1} parent=1 // pred_fallthru
      _
    // Predicated region
    $region18: #{physical_constraint_layer.1} parent=1 // pred_check
      _
    $region19: #{physical_constraint_layer.1} parent=1 // pred_check_branch
      %74 = sbr.rel (0) target = $region21
    $region20: #{physical_constraint_layer.1} parent=1 // pred_region
      %76 = dma.done [#allocation3], 128
    $region21: #{physical_constraint_layer.1} parent=1 // pred_fallthru
      _
    %77 = vsyncpa [#allocation3], 1

</llo_original>
